<compile_context>
chip_gen: v6e
topology: v6e:2x2x1
jax: 0.10.0
libtpu: 0.0.40
codegen_flags: <defaults>
</compile_context>

<pallas_src>
import functools
import math

import jax
import jax.numpy as jnp
from jax.experimental import pallas as pl
from jax.experimental.pallas import tpu as pltpu  # noqa: F401  (TPU backend)

# ----------------------------- config (matches module semantics) -----------------------------
CFG = dict(emb_dim=32, context_length=8, n_heads=4, drop_rate=0.0, qkv_bias=True)
BATCH = 2
EPS = 1e-5
MXU_DTYPE = jnp.bfloat16   # MXU operand dtype (native on v6e/v7x; v5e MXU also takes bf16)


# ----------------------------------------- Pallas kernel -------------------------------------
def transformer_block_kernel(
    x_ref,        # (N, E)   f32   folded B*T token rows
    mask_ref,     # (N, N)   f32   additive block-diagonal causal mask (0 / -1e30)
    pvec_ref,     # (8, 4E)  f32   packed small params (LN scales/shifts + all biases)
    wqkv_ref,     # (E, 3E)  bf16  fused [Wq | Wk | Wv]
    wo_ref,       # (E, E)   bf16  output projection
    w1_ref,       # (E, 4E)  bf16  MLP up
    w2_ref,       # (4E, E)  bf16  MLP down
    out_ref,      # (N, E)   f32
    *, num_heads: int, emb_dim: int,
):
    x = x_ref[...]                       # (N, E) f32
    N = x.shape[0]
    E = emb_dim
    H = num_heads
    Dh = E // H

    # Static slices of the packed parameter buffer (free — no extra DMAs, lane offset 0).
    ln1_s = pvec_ref[0:1, 0:E]
    ln1_b = pvec_ref[1:2, 0:E]
    ln2_s = pvec_ref[2:3, 0:E]
    ln2_b = pvec_ref[3:4, 0:E]
    bo    = pvec_ref[4:5, 0:E]
    b2    = pvec_ref[5:6, 0:E]
    bqkv  = pvec_ref[6:7, 0:3 * E]
    b1    = pvec_ref[7:8, 0:4 * E]

    def layernorm(v, scale, shift):
        mean = jnp.mean(v, axis=-1, keepdims=True)
        var = jnp.mean(jnp.square(v - mean), axis=-1, keepdims=True)   # unbiased=False
        return (v - mean) * jax.lax.rsqrt(var + EPS) * scale + shift

    # ---- sub-block 1: LN1 -> causal multi-head attention -> residual ----
    h = layernorm(x, ln1_s, ln1_b)                                     # (N, E) f32

    # ONE fused QKV matmul: bf16 operands, f32 accumulation, bias added in f32.
    qkv = jnp.dot(h.astype(wqkv_ref.dtype), wqkv_ref[...],
                  preferred_element_type=jnp.float32) + bqkv           # (N, 3E) f32
    qkv = qkv.astype(MXU_DTYPE)

    # Layout-only head split (no MXU work): lanes -> leading head-batch axis.
    def split_heads(base):                                             # -> (H, N, Dh)
        return jnp.stack(
            [qkv[:, base + hh * Dh: base + (hh + 1) * Dh] for hh in range(H)], axis=0)

    q = split_heads(0)
    k = split_heads(E)
    v = split_heads(2 * E)

    scale = 1.0 / math.sqrt(Dh)
    scores = jnp.einsum('hqd,hkd->hqk', q, k,
                        preferred_element_type=jnp.float32) * scale    # (H, N, N) f32
    scores = scores + mask_ref[...][None]                              # precomputed causal mask
    scores = scores - jnp.max(scores, axis=-1, keepdims=True)
    p = jnp.exp(scores)
    p = p / jnp.sum(p, axis=-1, keepdims=True)                         # exact softmax
    ctx = jnp.einsum('hqk,hkd->hqd', p.astype(MXU_DTYPE), v,
                     preferred_element_type=jnp.float32)               # (H, N, Dh) f32

    # Merge heads back onto lanes, then ONE (N,E)@(E,E) output projection.
    ctx2 = jnp.concatenate([ctx[hh] for hh in range(H)], axis=-1)      # (N, E)
    attn = jnp.dot(ctx2.astype(wo_ref.dtype), wo_ref[...],
                   preferred_element_type=jnp.float32) + bo            # (N, E)
    # drop_shortcut is identity (eval / drop_rate = 0)
    x1 = x + attn

    # ---- sub-block 2: LN2 -> FeedForward (Linear, tanh-GELU, Linear) -> residual ----
    h2 = layernorm(x1, ln2_s, ln2_b)
    ff = jnp.dot(h2.astype(w1_ref.dtype), w1_ref[...],
                 preferred_element_type=jnp.float32) + b1              # (N, 4E)
    ff = 0.5 * ff * (1.0 + jnp.tanh(math.sqrt(2.0 / math.pi)
                                    * (ff + 0.044715 * ff * ff * ff)))
    ff = jnp.dot(ff.astype(w2_ref.dtype), w2_ref[...],
                 preferred_element_type=jnp.float32) + b2              # (N, E)

    out_ref[...] = x1 + ff


# ------------------------------------------ wrapper -------------------------------------------
def transformer_block(x, params, *, num_heads):
    B, T, E = x.shape
    H = num_heads
    N = B * T
    (ln1_s, ln1_b, wq, bq, wk, bk, wv, bv, wo, bo,
     ln2_s, ln2_b, w1, b1, w2, b2) = params

    # Host-side (free) fusion / packing.
    wqkv = jnp.concatenate([wq, wk, wv], axis=1).astype(MXU_DTYPE)     # (E, 3E)
    bqkv = jnp.concatenate([bq, bk, bv], axis=0)                       # (3E,)

    P = 4 * E
    def row(v):                                                        # pad to one (P,) lane row
        v = v.reshape(-1).astype(jnp.float32)
        return jnp.pad(v, (0, P - v.shape[0]))
    pvec = jnp.stack([row(ln1_s), row(ln1_b), row(ln2_s), row(ln2_b),
                      row(bo), row(b2), row(bqkv), row(b1)], axis=0)   # (8, 4E)

    # Additive block-diagonal causal mask over the folded B*T axis (compile-time constant).
    r = jnp.arange(N)[:, None]
    c = jnp.arange(N)[None, :]
    ok = (c <= r) & ((r // T) == (c // T))
    mask = jnp.where(ok, 0.0, -1e30).astype(jnp.float32)               # (N, N)

    x2d = x.reshape(N, E)                                              # fold batch*seq (free)
    kernel = functools.partial(transformer_block_kernel, num_heads=H, emb_dim=E)

    # Single invocation, no grid: all operands whole-array resident in VMEM (<100 KB total).
    out = pl.pallas_call(
        kernel,
        out_shape=jax.ShapeDtypeStruct((N, E), jnp.float32),
    )(
        x2d, mask, pvec,
        wqkv,
        wo.astype(MXU_DTYPE),
        w1.astype(MXU_DTYPE),
        w2.astype(MXU_DTYPE),
    )
    return out.reshape(B, T, E)


# -------------------------------------- pure-JAX reference ------------------------------------
def reference(x, params, *, num_heads):
    (ln1_s, ln1_b, wq, bq, wk, bk, wv, bv, wo, bo,
     ln2_s, ln2_b, w1, b1, w2, b2) = params
    B, T, E = x.shape
    H = num_heads
    Dh = E // H

    def ln(v, s, b):
        m = v.mean(-1, keepdims=True)
        var = ((v - m) ** 2).mean(-1, keepdims=True)
        return (v - m) / jnp.sqrt(var + EPS) * s + b

    h = ln(x, ln1_s, ln1_b)
    q = (h @ wq + bq).reshape(B, T, H, Dh).transpose(0, 2, 1, 3)
    k = (h @ wk + bk).reshape(B, T, H, Dh).transpose(0, 2, 1, 3)
    v = (h @ wv + bv).reshape(B, T, H, Dh).transpose(0, 2, 1, 3)
    scores = q @ k.transpose(0, 1, 3, 2) / jnp.sqrt(jnp.float32(Dh))
    mask = jnp.triu(jnp.ones((T, T), bool), k=1)
    scores = jnp.where(mask, -jnp.inf, scores)
    p = jax.nn.softmax(scores, axis=-1)
    ctx = (p @ v).transpose(0, 2, 1, 3).reshape(B, T, E)
    x1 = x + (ctx @ wo + bo)
    h2 = ln(x1, ln2_s, ln2_b)
    ff = h2 @ w1 + b1
    ff = 0.5 * ff * (1.0 + jnp.tanh(jnp.sqrt(2.0 / jnp.pi) * (ff + 0.044715 * ff ** 3)))
    return x1 + (ff @ w2 + b2)


# --------------------------------------------- main -------------------------------------------
if __name__ == "__main__":
    E = CFG["emb_dim"]
    T = CFG["context_length"]
    H = CFG["n_heads"]

    key = jax.random.PRNGKey(0)
    keys = jax.random.split(key, 16)

    x = jax.random.normal(keys[0], (BATCH, T, E), dtype=jnp.float32)

    init = lambda k, shape: (0.02 * jax.random.normal(k, shape)).astype(jnp.float32)
    params = (
        jnp.ones((1, E), jnp.float32),     # ln1 scale
        jnp.zeros((1, E), jnp.float32),    # ln1 shift
        init(keys[1], (E, E)),             # Wq (right-multiply layout: x @ W)
        init(keys[2], (E,)),               # bq  (qkv_bias=True)
        init(keys[3], (E, E)),             # Wk
        init(keys[4], (E,)),               # bk
        init(keys[5], (E, E)),             # Wv
        init(keys[6], (E,)),               # bv
        init(keys[7], (E, E)),             # Wo (out_proj)
        init(keys[8], (E,)),               # bo
        jnp.ones((1, E), jnp.float32),     # ln2 scale
        jnp.zeros((1, E), jnp.float32),    # ln2 shift
        init(keys[9], (E, 4 * E)),         # W1
        init(keys[10], (4 * E,)),          # b1
        init(keys[11], (4 * E, E)),        # W2
        init(keys[12], (E,)),              # b2
    )

    out = transformer_block(x, params, num_heads=H)
    out = jax.block_until_ready(out)

    ref = reference(x, params, num_heads=H)
    assert out.shape == (BATCH, T, E)
    # Softmax uses exact division now; remaining deviation vs the f32 reference comes only
    # from bf16 MXU operands (weights + activation casts), well inside 2e-2 at these scales.
    assert jnp.max(jnp.abs(out - ref)) < 2e-2, "mismatch vs pure-JAX reference"

    print("KERNEL_OK")
</pallas_src>

<mosaic_0001>
module attributes {stable_mosaic.version = 11 : i64} {
  func.func @transformer_block_kernel(%arg0: memref<16x32xf32, #tpu.memory_space<vmem>>, %arg1: memref<16x16xf32, #tpu.memory_space<vmem>>, %arg2: memref<8x128xf32, #tpu.memory_space<vmem>>, %arg3: memref<32x96xbf16, #tpu.memory_space<vmem>>, %arg4: memref<32x32xbf16, #tpu.memory_space<vmem>>, %arg5: memref<32x128xbf16, #tpu.memory_space<vmem>>, %arg6: memref<128x32xbf16, #tpu.memory_space<vmem>>, %arg7: memref<16x32xf32, #tpu.memory_space<vmem>>) attributes {dimension_semantics = [], scalar_prefetch = 0 : i64, scratch_operands = 0 : i64, tpu.core_type = #tpu.core_type<tc>} {
    %c0 = arith.constant 0 : index
    %c0_0 = arith.constant 0 : index
    %0 = vector.load %arg0[%c0, %c0_0] : memref<16x32xf32, #tpu.memory_space<vmem>>, vector<16x32xf32>
    %c0_1 = arith.constant 0 : index
    %c0_2 = arith.constant 0 : index
    %1 = vector.load %arg2[%c0_1, %c0_2] : memref<8x128xf32, #tpu.memory_space<vmem>>, vector<1x32xf32>
    %c1 = arith.constant 1 : index
    %c0_3 = arith.constant 0 : index
    %2 = vector.load %arg2[%c1, %c0_3] : memref<8x128xf32, #tpu.memory_space<vmem>>, vector<1x32xf32>
    %c2 = arith.constant 2 : index
    %c0_4 = arith.constant 0 : index
    %3 = vector.load %arg2[%c2, %c0_4] : memref<8x128xf32, #tpu.memory_space<vmem>>, vector<1x32xf32>
    %c3 = arith.constant 3 : index
    %c0_5 = arith.constant 0 : index
    %4 = vector.load %arg2[%c3, %c0_5] : memref<8x128xf32, #tpu.memory_space<vmem>>, vector<1x32xf32>
    %c4 = arith.constant 4 : index
    %c0_6 = arith.constant 0 : index
    %5 = vector.load %arg2[%c4, %c0_6] : memref<8x128xf32, #tpu.memory_space<vmem>>, vector<1x32xf32>
    %c5 = arith.constant 5 : index
    %c0_7 = arith.constant 0 : index
    %6 = vector.load %arg2[%c5, %c0_7] : memref<8x128xf32, #tpu.memory_space<vmem>>, vector<1x32xf32>
    %c6 = arith.constant 6 : index
    %c0_8 = arith.constant 0 : index
    %7 = vector.load %arg2[%c6, %c0_8] : memref<8x128xf32, #tpu.memory_space<vmem>>, vector<1x96xf32>
    %c7 = arith.constant 7 : index
    %c0_9 = arith.constant 0 : index
    %8 = vector.load %arg2[%c7, %c0_9] : memref<8x128xf32, #tpu.memory_space<vmem>>, vector<1x128xf32>
    %cst = arith.constant dense<0.000000e+00> : vector<16xf32>
    %9 = vector.multi_reduction <add>, %0, %cst [1] : vector<16x32xf32> to vector<16xf32>
    %10 = vector.shape_cast %9 : vector<16xf32> to vector<16x1xf32>
    %cst_10 = arith.constant 3.200000e+01 : f32
    %11 = vector.broadcast %cst_10 : f32 to vector<16x1xf32>
    %12 = arith.divf %10, %11 : vector<16x1xf32>
    %13 = vector.broadcast %12 : vector<16x1xf32> to vector<16x32xf32>
    %14 = arith.subf %0, %13 : vector<16x32xf32>
    %15 = arith.mulf %14, %14 : vector<16x32xf32>
    %cst_11 = arith.constant dense<0.000000e+00> : vector<16xf32>
    %16 = vector.multi_reduction <add>, %15, %cst_11 [1] : vector<16x32xf32> to vector<16xf32>
    %17 = vector.shape_cast %16 : vector<16xf32> to vector<16x1xf32>
    %cst_12 = arith.constant 3.200000e+01 : f32
    %18 = vector.broadcast %cst_12 : f32 to vector<16x1xf32>
    %19 = arith.divf %17, %18 : vector<16x1xf32>
    %20 = vector.broadcast %12 : vector<16x1xf32> to vector<16x32xf32>
    %21 = arith.subf %0, %20 : vector<16x32xf32>
    %cst_13 = arith.constant 9.99999974E-6 : f32
    %22 = vector.broadcast %cst_13 : f32 to vector<16x1xf32>
    %23 = arith.addf %19, %22 : vector<16x1xf32>
    %24 = math.rsqrt %23 : vector<16x1xf32>
    %25 = vector.broadcast %24 : vector<16x1xf32> to vector<16x32xf32>
    %26 = arith.mulf %21, %25 : vector<16x32xf32>
    %27 = vector.broadcast %1 : vector<1x32xf32> to vector<16x32xf32>
    %28 = arith.mulf %26, %27 : vector<16x32xf32>
    %29 = vector.broadcast %2 : vector<1x32xf32> to vector<16x32xf32>
    %30 = arith.addf %28, %29 : vector<16x32xf32>
    %31 = arith.truncf %30 : vector<16x32xf32> to vector<16x32xbf16>
    %c0_14 = arith.constant 0 : index
    %c0_15 = arith.constant 0 : index
    %32 = vector.load %arg3[%c0_14, %c0_15] : memref<32x96xbf16, #tpu.memory_space<vmem>>, vector<32x96xbf16>
    %cst_16 = arith.constant dense<0.000000e+00> : vector<16x96xf32>
    %33 = tpu.matmul %31, %32, %cst_16 {dimension_numbers = #tpu.dot_dimension_numbers<[1], [0], [0], [1], [0, 0, 1, 1], [], []>} : vector<16x32xbf16>, vector<32x96xbf16>, vector<16x96xf32> -> vector<16x96xf32>
    %34 = vector.broadcast %7 : vector<1x96xf32> to vector<16x96xf32>
    %35 = arith.addf %33, %34 : vector<16x96xf32>
    %36 = arith.truncf %35 : vector<16x96xf32> to vector<16x96xbf16>
    %37 = vector.extract_strided_slice %36 {offsets = [0, 0], sizes = [16, 8], strides = [1, 1]} : vector<16x96xbf16> to vector<16x8xbf16>
    %38 = vector.extract_strided_slice %36 {offsets = [0, 8], sizes = [16, 8], strides = [1, 1]} : vector<16x96xbf16> to vector<16x8xbf16>
    %39 = vector.extract_strided_slice %36 {offsets = [0, 16], sizes = [16, 8], strides = [1, 1]} : vector<16x96xbf16> to vector<16x8xbf16>
    %40 = vector.extract_strided_slice %36 {offsets = [0, 24], sizes = [16, 8], strides = [1, 1]} : vector<16x96xbf16> to vector<16x8xbf16>
    %41 = vector.shape_cast %37 : vector<16x8xbf16> to vector<1x16x8xbf16>
    %42 = vector.shape_cast %38 : vector<16x8xbf16> to vector<1x16x8xbf16>
    %43 = vector.shape_cast %39 : vector<16x8xbf16> to vector<1x16x8xbf16>
    %44 = vector.shape_cast %40 : vector<16x8xbf16> to vector<1x16x8xbf16>
    %45 = tpu.concatenate %41, %42, %43, %44 in 0 : vector<1x16x8xbf16>, vector<1x16x8xbf16>, vector<1x16x8xbf16>, vector<1x16x8xbf16> -> vector<4x16x8xbf16>
    %46 = vector.extract_strided_slice %36 {offsets = [0, 32], sizes = [16, 8], strides = [1, 1]} : vector<16x96xbf16> to vector<16x8xbf16>
    %47 = vector.extract_strided_slice %36 {offsets = [0, 40], sizes = [16, 8], strides = [1, 1]} : vector<16x96xbf16> to vector<16x8xbf16>
    %48 = vector.extract_strided_slice %36 {offsets = [0, 48], sizes = [16, 8], strides = [1, 1]} : vector<16x96xbf16> to vector<16x8xbf16>
    %49 = vector.extract_strided_slice %36 {offsets = [0, 56], sizes = [16, 8], strides = [1, 1]} : vector<16x96xbf16> to vector<16x8xbf16>
    %50 = vector.shape_cast %46 : vector<16x8xbf16> to vector<1x16x8xbf16>
    %51 = vector.shape_cast %47 : vector<16x8xbf16> to vector<1x16x8xbf16>
    %52 = vector.shape_cast %48 : vector<16x8xbf16> to vector<1x16x8xbf16>
    %53 = vector.shape_cast %49 : vector<16x8xbf16> to vector<1x16x8xbf16>
    %54 = tpu.concatenate %50, %51, %52, %53 in 0 : vector<1x16x8xbf16>, vector<1x16x8xbf16>, vector<1x16x8xbf16>, vector<1x16x8xbf16> -> vector<4x16x8xbf16>
    %55 = vector.extract_strided_slice %36 {offsets = [0, 64], sizes = [16, 8], strides = [1, 1]} : vector<16x96xbf16> to vector<16x8xbf16>
    %56 = vector.extract_strided_slice %36 {offsets = [0, 72], sizes = [16, 8], strides = [1, 1]} : vector<16x96xbf16> to vector<16x8xbf16>
    %57 = vector.extract_strided_slice %36 {offsets = [0, 80], sizes = [16, 8], strides = [1, 1]} : vector<16x96xbf16> to vector<16x8xbf16>
    %58 = vector.extract_strided_slice %36 {offsets = [0, 88], sizes = [16, 8], strides = [1, 1]} : vector<16x96xbf16> to vector<16x8xbf16>
    %59 = vector.shape_cast %55 : vector<16x8xbf16> to vector<1x16x8xbf16>
    %60 = vector.shape_cast %56 : vector<16x8xbf16> to vector<1x16x8xbf16>
    %61 = vector.shape_cast %57 : vector<16x8xbf16> to vector<1x16x8xbf16>
    %62 = vector.shape_cast %58 : vector<16x8xbf16> to vector<1x16x8xbf16>
    %63 = tpu.concatenate %59, %60, %61, %62 in 0 : vector<1x16x8xbf16>, vector<1x16x8xbf16>, vector<1x16x8xbf16>, vector<1x16x8xbf16> -> vector<4x16x8xbf16>
    "tpu.trace_start"() <{level = 10 : i32, message = "hqd,hkd->hqk"}> : () -> ()
    %cst_17 = arith.constant dense<0.000000e+00> : vector<4x16x16xf32>
    %64 = tpu.matmul %45, %54, %cst_17 {dimension_numbers = #tpu.dot_dimension_numbers<[2], [2], [1], [1], [0, 0, 0, 1, 1, 1], [0], [0]>} : vector<4x16x8xbf16>, vector<4x16x8xbf16>, vector<4x16x16xf32> -> vector<4x16x16xf32>
    "tpu.trace_stop"() : () -> ()
    %cst_18 = arith.constant 0.353553385 : f32
    %65 = vector.broadcast %cst_18 : f32 to vector<4x16x16xf32>
    %66 = arith.mulf %64, %65 : vector<4x16x16xf32>
    %c0_19 = arith.constant 0 : index
    %c0_20 = arith.constant 0 : index
    %67 = vector.load %arg1[%c0_19, %c0_20] : memref<16x16xf32, #tpu.memory_space<vmem>>, vector<16x16xf32>
    %68 = vector.shape_cast %67 : vector<16x16xf32> to vector<1x16x16xf32>
    %69 = vector.broadcast %68 : vector<1x16x16xf32> to vector<4x16x16xf32>
    %70 = arith.addf %66, %69 : vector<4x16x16xf32>
    %cst_21 = arith.constant dense<0xFF800000> : vector<4x16xf32>
    %71 = vector.multi_reduction <maximumf>, %70, %cst_21 [2] : vector<4x16x16xf32> to vector<4x16xf32>
    %72 = vector.shape_cast %71 : vector<4x16xf32> to vector<4x16x1xf32>
    %73 = vector.broadcast %72 : vector<4x16x1xf32> to vector<4x16x16xf32>
    %74 = arith.subf %70, %73 : vector<4x16x16xf32>
    %75 = math.exp %74 : vector<4x16x16xf32>
    %cst_22 = arith.constant dense<0.000000e+00> : vector<4x16xf32>
    %76 = vector.multi_reduction <add>, %75, %cst_22 [2] : vector<4x16x16xf32> to vector<4x16xf32>
    %77 = vector.shape_cast %76 : vector<4x16xf32> to vector<4x16x1xf32>
    %78 = vector.broadcast %77 : vector<4x16x1xf32> to vector<4x16x16xf32>
    %79 = arith.divf %75, %78 : vector<4x16x16xf32>
    %80 = arith.truncf %79 : vector<4x16x16xf32> to vector<4x16x16xbf16>
    "tpu.trace_start"() <{level = 10 : i32, message = "hqk,hkd->hqd"}> : () -> ()
    %cst_23 = arith.constant dense<0.000000e+00> : vector<4x16x8xf32>
    %81 = tpu.matmul %80, %63, %cst_23 {dimension_numbers = #tpu.dot_dimension_numbers<[2], [1], [1], [2], [0, 0, 0, 1, 1, 2], [0], [0]>} : vector<4x16x16xbf16>, vector<4x16x8xbf16>, vector<4x16x8xf32> -> vector<4x16x8xf32>
    "tpu.trace_stop"() : () -> ()
    %82 = vector.extract_strided_slice %81 {offsets = [0, 0, 0], sizes = [1, 16, 8], strides = [1, 1, 1]} : vector<4x16x8xf32> to vector<1x16x8xf32>
    %83 = vector.shape_cast %82 : vector<1x16x8xf32> to vector<16x8xf32>
    %84 = vector.extract_strided_slice %81 {offsets = [1, 0, 0], sizes = [1, 16, 8], strides = [1, 1, 1]} : vector<4x16x8xf32> to vector<1x16x8xf32>
    %85 = vector.shape_cast %84 : vector<1x16x8xf32> to vector<16x8xf32>
    %86 = vector.extract_strided_slice %81 {offsets = [2, 0, 0], sizes = [1, 16, 8], strides = [1, 1, 1]} : vector<4x16x8xf32> to vector<1x16x8xf32>
    %87 = vector.shape_cast %86 : vector<1x16x8xf32> to vector<16x8xf32>
    %88 = vector.extract_strided_slice %81 {offsets = [3, 0, 0], sizes = [1, 16, 8], strides = [1, 1, 1]} : vector<4x16x8xf32> to vector<1x16x8xf32>
    %89 = vector.shape_cast %88 : vector<1x16x8xf32> to vector<16x8xf32>
    %90 = tpu.concatenate %83, %85, %87, %89 in 1 : vector<16x8xf32>, vector<16x8xf32>, vector<16x8xf32>, vector<16x8xf32> -> vector<16x32xf32>
    %91 = arith.truncf %90 : vector<16x32xf32> to vector<16x32xbf16>
    %c0_24 = arith.constant 0 : index
    %c0_25 = arith.constant 0 : index
    %92 = vector.load %arg4[%c0_24, %c0_25] : memref<32x32xbf16, #tpu.memory_space<vmem>>, vector<32x32xbf16>
    %cst_26 = arith.constant dense<0.000000e+00> : vector<16x32xf32>
    %93 = tpu.matmul %91, %92, %cst_26 {dimension_numbers = #tpu.dot_dimension_numbers<[1], [0], [0], [1], [0, 0, 1, 1], [], []>} : vector<16x32xbf16>, vector<32x32xbf16>, vector<16x32xf32> -> vector<16x32xf32>
    %94 = vector.broadcast %5 : vector<1x32xf32> to vector<16x32xf32>
    %95 = arith.addf %93, %94 : vector<16x32xf32>
    %96 = arith.addf %0, %95 : vector<16x32xf32>
    %cst_27 = arith.constant dense<0.000000e+00> : vector<16xf32>
    %97 = vector.multi_reduction <add>, %96, %cst_27 [1] : vector<16x32xf32> to vector<16xf32>
    %98 = vector.shape_cast %97 : vector<16xf32> to vector<16x1xf32>
    %cst_28 = arith.constant 3.200000e+01 : f32
    %99 = vector.broadcast %cst_28 : f32 to vector<16x1xf32>
    %100 = arith.divf %98, %99 : vector<16x1xf32>
    %101 = vector.broadcast %100 : vector<16x1xf32> to vector<16x32xf32>
    %102 = arith.subf %96, %101 : vector<16x32xf32>
    %103 = arith.mulf %102, %102 : vector<16x32xf32>
    %cst_29 = arith.constant dense<0.000000e+00> : vector<16xf32>
    %104 = vector.multi_reduction <add>, %103, %cst_29 [1] : vector<16x32xf32> to vector<16xf32>
    %105 = vector.shape_cast %104 : vector<16xf32> to vector<16x1xf32>
    %cst_30 = arith.constant 3.200000e+01 : f32
    %106 = vector.broadcast %cst_30 : f32 to vector<16x1xf32>
    %107 = arith.divf %105, %106 : vector<16x1xf32>
    %108 = vector.broadcast %100 : vector<16x1xf32> to vector<16x32xf32>
    %109 = arith.subf %96, %108 : vector<16x32xf32>
    %cst_31 = arith.constant 9.99999974E-6 : f32
    %110 = vector.broadcast %cst_31 : f32 to vector<16x1xf32>
    %111 = arith.addf %107, %110 : vector<16x1xf32>
    %112 = math.rsqrt %111 : vector<16x1xf32>
    %113 = vector.broadcast %112 : vector<16x1xf32> to vector<16x32xf32>
    %114 = arith.mulf %109, %113 : vector<16x32xf32>
    %115 = vector.broadcast %3 : vector<1x32xf32> to vector<16x32xf32>
    %116 = arith.mulf %114, %115 : vector<16x32xf32>
    %117 = vector.broadcast %4 : vector<1x32xf32> to vector<16x32xf32>
    %118 = arith.addf %116, %117 : vector<16x32xf32>
    %119 = arith.truncf %118 : vector<16x32xf32> to vector<16x32xbf16>
    %c0_32 = arith.constant 0 : index
    %c0_33 = arith.constant 0 : index
    %120 = vector.load %arg5[%c0_32, %c0_33] : memref<32x128xbf16, #tpu.memory_space<vmem>>, vector<32x128xbf16>
    %cst_34 = arith.constant dense<0.000000e+00> : vector<16x128xf32>
    %121 = tpu.matmul %119, %120, %cst_34 {dimension_numbers = #tpu.dot_dimension_numbers<[1], [0], [0], [1], [0, 0, 1, 1], [], []>} : vector<16x32xbf16>, vector<32x128xbf16>, vector<16x128xf32> -> vector<16x128xf32>
    %122 = vector.broadcast %8 : vector<1x128xf32> to vector<16x128xf32>
    %123 = arith.addf %121, %122 : vector<16x128xf32>
    %cst_35 = arith.constant 5.000000e-01 : f32
    %124 = vector.broadcast %cst_35 : f32 to vector<16x128xf32>
    %125 = arith.mulf %124, %123 : vector<16x128xf32>
    %cst_36 = arith.constant 4.471500e-02 : f32
    %126 = vector.broadcast %cst_36 : f32 to vector<16x128xf32>
    %127 = arith.mulf %126, %123 : vector<16x128xf32>
    %128 = arith.mulf %127, %123 : vector<16x128xf32>
    %129 = arith.mulf %128, %123 : vector<16x128xf32>
    %130 = arith.addf %123, %129 : vector<16x128xf32>
    %cst_37 = arith.constant 0.797884583 : f32
    %131 = vector.broadcast %cst_37 : f32 to vector<16x128xf32>
    %132 = arith.mulf %131, %130 : vector<16x128xf32>
    %133 = math.tanh %132 : vector<16x128xf32>
    %cst_38 = arith.constant 1.000000e+00 : f32
    %134 = vector.broadcast %cst_38 : f32 to vector<16x128xf32>
    %135 = arith.addf %134, %133 : vector<16x128xf32>
    %136 = arith.mulf %125, %135 : vector<16x128xf32>
    %137 = arith.truncf %136 : vector<16x128xf32> to vector<16x128xbf16>
    %c0_39 = arith.constant 0 : index
    %c0_40 = arith.constant 0 : index
    %138 = vector.load %arg6[%c0_39, %c0_40] : memref<128x32xbf16, #tpu.memory_space<vmem>>, vector<128x32xbf16>
    %cst_41 = arith.constant dense<0.000000e+00> : vector<16x32xf32>
    %139 = tpu.matmul %137, %138, %cst_41 {dimension_numbers = #tpu.dot_dimension_numbers<[1], [0], [0], [1], [0, 0, 1, 1], [], []>} : vector<16x128xbf16>, vector<128x32xbf16>, vector<16x32xf32> -> vector<16x32xf32>
    %140 = vector.broadcast %6 : vector<1x32xf32> to vector<16x32xf32>
    %141 = arith.addf %139, %140 : vector<16x32xf32>
    %142 = arith.addf %96, %141 : vector<16x32xf32>
    %c0_42 = arith.constant 0 : index
    %c0_43 = arith.constant 0 : index
    %143 = vector.load %arg7[%c0_42, %c0_43] : memref<16x32xf32, #tpu.memory_space<vmem>>, vector<16x32xf32>
    tpu.vector_store %arg7[%c0_42, %c0_43], %142 {strides = array<i32>} : memref<16x32xf32, #tpu.memory_space<vmem>>, vector<16x32xf32>,
    return
  }
}

</mosaic_0001>

<llo_original>
// kernel: tpu_custom_call.1
$region0: #{tpu_custom_call.1}
  #allocation0 [shape = 'u32[]', space=smem, size = 0x4, offset = 0x4, fixed_abs, tag = 'smem constant byte address 0x4 - core index']
  #allocation1 [shape = 'u32[144,128]{1,0:T(1,128)}', space=vmem, size = 0x12000, scoped, tag = 'internal scratch']
  %s0 = inlined_call_operand.vmem [shape: f32[16,32], index: 0, kind: input, shape index: {}]
  %s1 = inlined_call_operand.vmem [shape: f32[16,16], index: 1, kind: input, shape index: {}]
  %s2 = inlined_call_operand.hbm [shape: f32[8,128], index: 2, kind: input, shape index: {}]
  %s3 = inlined_call_operand.vmem [shape: bf16[32,96], index: 3, kind: input, shape index: {}]
  %s4 = inlined_call_operand.vmem [shape: bf16[32,32], index: 4, kind: input, shape index: {}]
  %s5 = inlined_call_operand.vmem [shape: bf16[32,128], index: 5, kind: input, shape index: {}]
  %s6 = inlined_call_operand.vmem [shape: bf16[128,32], index: 6, kind: input, shape index: {}]
  %s7 = inlined_call_operand.hbm [shape: f32[16,32], index: 7, kind: output, shape index: {}]
  %s8 = sld [smem:[#allocation0]]
  $region42: #{tpu_custom_call.1} parent=0
    _
  %s10 = ssub.s32 1, %s8
  %s11 = scalar_select 0, %s10, %s8
  $region1: #{tpu_custom_call.1} parent=0
    #allocation2 [shape = 'u8[4096]{0}', space=vmem, size = 0x1000, scoped, tag = 'input window, operand 2, single buffered']
    #allocation3 [shape = 's32[1]{0}', space=sflag, size = 0x4, scoped, tag = 'scoped memory for tpu_custom_call.1']
    #allocation4 [shape = 's32[1]{0}', space=sflag, size = 0x4, scoped, tag = 'scoped memory for tpu_custom_call.1']
    #allocation5 [shape = 'u8[8192]{0}', space=vmem, size = 0x2000, scoped, tag = 'output window, operand 0, single buffered']
    %12 = vsyncpa [#allocation3], 0
    %13 = vsyncpa [#allocation4], 0
    // Predicated region
    $region2: #{tpu_custom_call.1} parent=1 // pred_check
      _
    $region3: #{tpu_custom_call.1} parent=1 // pred_check_branch
      %15 = sbr.rel (0) target = $region5
    $region4: #{tpu_custom_call.1} parent=1 // pred_region
      _
    $region5: #{tpu_custom_call.1} parent=1 // pred_fallthru
      _
    // Predicated region
    $region6: #{tpu_custom_call.1} parent=1 // pred_check
      _
    $region7: #{tpu_custom_call.1} parent=1 // pred_check_branch
      %17 = sbr.rel (0) target = $region9
    $region8: #{tpu_custom_call.1} parent=1 // pred_region
      _
    $region9: #{tpu_custom_call.1} parent=1 // pred_fallthru
      _
    // Predicated region
    $region10: #{tpu_custom_call.1} parent=1 // pred_check
      _
    $region11: #{tpu_custom_call.1} parent=1 // pred_check_branch
      %19 = sbr.rel (0) target = $region13
    $region12: #{tpu_custom_call.1} parent=1 // pred_region
      %s21 = ssub.s32 128, 128
      %22 = vsyncadd [#allocation3], %s21
      %s24 = sshll.u32 [#allocation2], 4
      %s25 = int_to_ptr.vmem [resolvable:$true] %s24
      %27 = dma.hbm_to_vmem [thread:$0]  %s2, 128, %s25, [#allocation3]
    $region13: #{tpu_custom_call.1} parent=1 // pred_fallthru
      _
    // Predicated region
    $region14: #{tpu_custom_call.1} parent=1 // pred_check
      _
    $region15: #{tpu_custom_call.1} parent=1 // pred_check_branch
      %29 = sbr.rel (0) target = $region17
    $region16: #{tpu_custom_call.1} parent=1 // pred_region
      _
    $region17: #{tpu_custom_call.1} parent=1 // pred_fallthru
      _
    // Predicated region
    $region18: #{tpu_custom_call.1} parent=1 // pred_check
      _
    $region19: #{tpu_custom_call.1} parent=1 // pred_check_branch
      %31 = sbr.rel (0) target = $region21
    $region20: #{tpu_custom_call.1} parent=1 // pred_region
      _
    $region21: #{tpu_custom_call.1} parent=1 // pred_fallthru
      _
    // Predicated region
    $region22: #{tpu_custom_call.1} parent=1 // pred_check
      _
    $region23: #{tpu_custom_call.1} parent=1 // pred_check_branch
      %33 = sbr.rel (0) target = $region25
    $region24: #{tpu_custom_call.1} parent=1 // pred_region
      _
    $region25: #{tpu_custom_call.1} parent=1 // pred_fallthru
      _
    // Predicated region
    $region26: #{tpu_custom_call.1} parent=1 // pred_check
      _
    $region27: #{tpu_custom_call.1} parent=1 // pred_check_branch
      %35 = sbr.rel (0) target = $region29
    $region28: #{tpu_custom_call.1} parent=1 // pred_region
      _
    $region29: #{tpu_custom_call.1} parent=1 // pred_fallthru
      _
    // Predicated region
    $region30: #{tpu_custom_call.1} parent=1 // pred_check
      _
    $region31: #{tpu_custom_call.1} parent=1 // pred_check_branch
      %37 = sbr.rel (0) target = $region33
    $region32: #{tpu_custom_call.1} parent=1 // pred_region
      %38 = dma.done [#allocation3], 128
    $region33: #{tpu_custom_call.1} parent=1 // pred_fallthru
      _
    %v40 = vld [vmem:[%s0] sm:$0xff]
    %v41 = vld [vmem:[%s0 + $0x8] sm:$0xff]
    %v42 = vld [vmem:[#allocation2] sm:$0x1]
    %v43 = vld [vmem:[#allocation2 + $0x1] sm:$0x1]
    %v44 = vld [vmem:[#allocation2 + $0x2] sm:$0x1]
    %v45 = vld [vmem:[#allocation2 + $0x3] sm:$0x1]
    %v46 = vld [vmem:[#allocation2 + $0x4] sm:$0x1]
    %v47 = vld [vmem:[#allocation2 + $0x5] sm:$0x1]
    %v48 = vld [vmem:[#allocation2 + $0x6] sm:$0x1]
    %v49 = vld [vmem:[#allocation2 + $0x7] sm:$0x1]
    %vm50 = vcmask 261120
    %v51 = vsel %vm50, %v40, 0.0
    %52 = vadd.xlane.f32.xlu0 %v51
    %v53 = vpop.xlane.xlu0 %52
    %v54 = vsel %vm50, %v41, 0.0
    %55 = vadd.xlane.f32.xlu0 %v54
    %v56 = vpop.xlane.xlu0 %55
    %v57 = vrcp.pop 32.0
    %v58 = vmul.f32 %v53, %v57
    %v59 = vmul.f32 %v56, %v57
    %v60 = vsub.f32 %v40, %v58
    %v61 = vsub.f32 %v41, %v59
    %v62 = vmul.f32 %v60, %v60
    %v63 = vmul.f32 %v61, %v61
    %v64 = vsel %vm50, %v62, 0.0
    %65 = vadd.xlane.f32.xlu0 %v64
    %v66 = vpop.xlane.xlu0 %65
    %v67 = vsel %vm50, %v63, 0.0
    %68 = vadd.xlane.f32.xlu0 %v67
    %v69 = vpop.xlane.xlu0 %68
    %v70 = vmul.f32 %v66, %v57
    %v71 = vmul.f32 %v69, %v57
    %v72 = vadd.f32 %v70, 1e-05
    %v73 = vadd.f32 %v71, 1e-05
    %v74 = vrsqrt.pop %v72
    %v75 = vrsqrt.pop %v73
    %v76 = vmul.f32 %v60, %v74
    %v77 = vmul.f32 %v61, %v75
    %v78 = vlaneseq
    %v79 = vshrl.u32 %v78, 7
    %v80 = vsub.s32 0, %v79
    %v81 = vrot.slane %v42, %v80
    %v82 = vmul.f32 %v76, %v81
    %v83 = vmul.f32 %v77, %v81
    %v84 = vlaneseq
    %v85 = vshrl.u32 %v84, 7
    %v86 = vsub.s32 0, %v85
    %v87 = vrot.slane %v43, %v86
    %v88 = vadd.f32 %v82, %v87
    %v89 = vadd.f32 %v83, %v87
    %v90 = vpack.c.bf16 %v89, %v88
    %v91 = vld [vmem:[%s3] sm:$0xf]
    %v92 = vld [vmem:[%s3 + $0x4] sm:$0xf]
    %v93 = vld [vmem:[%s3 + $0x8] sm:$0xf]
    %v94 = vld [vmem:[%s3 + $0xc] sm:$0xf]
    %v95 = vlaneseq
    %v96 = vshrl.u32 %v95, 7
    %v97 = vsub.s32 0, %v96
    %v98 = vrot.slane %v48, %v97
    %v103 = vunpack.c.l.b16 %v91
    %v104 = vunpack.c.l.b16 %v92
    %v105 = vunpack.c.l.b16 %v93
    %v106 = vunpack.c.l.b16 %v94
    %v107 = vpack.c.b16 %v104, %v103
    %v108 = vpack.c.b16 %v106, %v105
    %v112 = vsel %vm50, %v90, 0
    %114 = vmatprep.subr.bf16.mxu0 0
    %115 = vmatpush1.bf16.msra.mxu0 0
    %116 = vmatprep.subr.bf16.mxu0 0
    %117 = vmatpush1.bf16.msra.mxu0 0
    %118 = vmatprep.subr.bf16.mxu0 0
    %119 = vmatpush1.bf16.msra.mxu0 0
    %120 = vmatprep.subr.bf16.mxu0 0
    %121 = vmatpush1.bf16.msra.mxu0 0
    %122 = vmatprep.subr.bf16.mxu0 0
    %123 = vmatpush1.bf16.msra.mxu0 0
    %124 = vmatprep.subr.bf16.mxu0 0
    %125 = vmatpush1.bf16.msra.mxu0 0
    %126 = vmatprep.subr.bf16.mxu0 0
    %127 = vmatpush1.bf16.msra.mxu0 %v108
    %128 = vmatprep.subr.bf16.mxu0 0
    %129 = vmatpush1.bf16.msra.mxu0 %v107
    %130 = vmatprep.subr.bf16.mxu0 0
    %131 = vmatpush2.bf16.msra.mxu0 0
    %132 = vmatprep.subr.bf16.mxu0 0
    %133 = vmatpush2.bf16.msra.mxu0 0
    %134 = vmatprep.subr.bf16.mxu0 0
    %135 = vmatpush2.bf16.msra.mxu0 0
    %136 = vmatprep.subr.bf16.mxu0 0
    %137 = vmatpush2.bf16.msra.mxu0 0
    %138 = vmatprep.subr.bf16.mxu0 0
    %139 = vmatpush2.bf16.msra.mxu0 0
    %140 = vmatprep.subr.bf16.mxu0 0
    %141 = vmatpush2.bf16.msra.mxu0 0
    %142 = vmatprep.subr.bf16.mxu0 0
    %143 = vmatpush2.bf16.msra.mxu0 0
    %144 = vmatprep.subr.bf16.mxu0 0
    %145 = vmatpush2.bf16.msra.mxu0 0
    %146 = vmatprep.mubr.bf16.mxu0 0
    %147 = vmatmul.mubr.bf16.gmra.mxu0 %v112
    %v148 = vpop.f32.mrf.mxu0
    %v149 = vadd.f32 %v98, %v148
    %v150 = vpop.f32.mrf.mxu0
    %v151 = vpop.f32.mrf.mxu0
    %v152 = vadd.f32 %v98, %v151
    %v153 = vpop.f32.mrf.mxu0
    %154 = vdwg.mxu0
    %v155 = vpack.c.bf16 %v152, %v149
    %157 = vrot.lane.b32.xlu0 %v155, 120
    %v158 = vpop.permute.xlu0 %157
    %159 = vrot.lane.b32.xlu0 %v155, 112
    %v160 = vpop.permute.xlu0 %159
    %161 = vrot.lane.b32.xlu0 %v155, 104
    %v162 = vpop.permute.xlu0 %161
    %163 = vrot.lane.b32.xlu0 %v155, 96
    %v164 = vpop.permute.xlu0 %163
    %vm165 = vcmask 64512
    %v167 = vsel %vm165, %v155, 0
    %v170 = vsel %vm165, %v164, 0
    %172 = vmatprep.subr.bf16.mxu0 0
    %173 = vmatpush1.bf16.xpose.msra.mxu0 0
    %174 = vmatprep.subr.bf16.mxu0 0
    %175 = vmatpush1.bf16.xpose.msra.mxu0 0
    %176 = vmatprep.subr.bf16.mxu0 0
    %177 = vmatpush1.bf16.xpose.msra.mxu0 0
    %178 = vmatprep.subr.bf16.mxu0 0
    %179 = vmatpush1.bf16.xpose.msra.mxu0 0
    %180 = vmatprep.subr.bf16.mxu0 0
    %181 = vmatpush1.bf16.xpose.msra.mxu0 0
    %182 = vmatprep.subr.bf16.mxu0 0
    %183 = vmatpush1.bf16.xpose.msra.mxu0 0
    %184 = vmatprep.subr.bf16.mxu0 0
    %185 = vmatpush1.bf16.xpose.msra.mxu0 0
    %186 = vmatprep.subr.bf16.mxu0 0
    %187 = vmatpush1.bf16.xpose.msra.mxu0 %v170
    %188 = vmatprep.subr.bf16.mxu0 0
    %189 = vmatpush2.bf16.xpose.msra.mxu0 0
    %190 = vmatprep.subr.bf16.mxu0 0
    %191 = vmatpush2.bf16.xpose.msra.mxu0 0
    %192 = vmatprep.subr.bf16.mxu0 0
    %193 = vmatpush2.bf16.xpose.msra.mxu0 0
    %194 = vmatprep.subr.bf16.mxu0 0
    %195 = vmatpush2.bf16.xpose.msra.mxu0 0
    %196 = vmatprep.subr.bf16.mxu0 0
    %197 = vmatpush2.bf16.xpose.msra.mxu0 0
    %198 = vmatprep.subr.bf16.mxu0 0
    %199 = vmatpush2.bf16.xpose.msra.mxu0 0
    %200 = vmatprep.subr.bf16.mxu0 0
    %201 = vmatpush2.bf16.xpose.msra.mxu0 0
    %202 = vmatprep.subr.bf16.mxu0 0
    %203 = vmatpush2.bf16.xpose.msra.mxu0 0
    %204 = vmatprep.mubr.bf16.mxu0 0
    %205 = vmatmul.mubr.bf16.gmra.mxu0 %v167
    %v206 = vpop.f32.mrf.mxu0
    %v207 = vadd.f32 0.0, %v206
    %v208 = vpop.f32.mrf.mxu0
    %v209 = vpop.f32.mrf.mxu0
    %v210 = vadd.f32 0.0, %v209
    %v211 = vpop.f32.mrf.mxu0
    %212 = vdwg.mxu0
    %213 = vrot.lane.b32.xlu0 %v158, 96
    %v214 = vpop.permute.xlu0 %213
    %v216 = vsel %vm165, %v158, 0
    %v219 = vsel %vm165, %v214, 0
    %221 = vmatprep.subr.bf16.mxu0 0
    %222 = vmatpush1.bf16.xpose.msra.mxu0 0
    %223 = vmatprep.subr.bf16.mxu0 0
    %224 = vmatpush1.bf16.xpose.msra.mxu0 0
    %225 = vmatprep.subr.bf16.mxu0 0
    %226 = vmatpush1.bf16.xpose.msra.mxu0 0
    %227 = vmatprep.subr.bf16.mxu0 0
    %228 = vmatpush1.bf16.xpose.msra.mxu0 0
    %229 = vmatprep.subr.bf16.mxu0 0
    %230 = vmatpush1.bf16.xpose.msra.mxu0 0
    %231 = vmatprep.subr.bf16.mxu0 0
    %232 = vmatpush1.bf16.xpose.msra.mxu0 0
    %233 = vmatprep.subr.bf16.mxu0 0
    %234 = vmatpush1.bf16.xpose.msra.mxu0 0
    %235 = vmatprep.subr.bf16.mxu0 0
    %236 = vmatpush1.bf16.xpose.msra.mxu0 %v219
    %237 = vmatprep.subr.bf16.mxu0 0
    %238 = vmatpush2.bf16.xpose.msra.mxu0 0
    %239 = vmatprep.subr.bf16.mxu0 0
    %240 = vmatpush2.bf16.xpose.msra.mxu0 0
    %241 = vmatprep.subr.bf16.mxu0 0
    %242 = vmatpush2.bf16.xpose.msra.mxu0 0
    %243 = vmatprep.subr.bf16.mxu0 0
    %244 = vmatpush2.bf16.xpose.msra.mxu0 0
    %245 = vmatprep.subr.bf16.mxu0 0
    %246 = vmatpush2.bf16.xpose.msra.mxu0 0
    %247 = vmatprep.subr.bf16.mxu0 0
    %248 = vmatpush2.bf16.xpose.msra.mxu0 0
    %249 = vmatprep.subr.bf16.mxu0 0
    %250 = vmatpush2.bf16.xpose.msra.mxu0 0
    %251 = vmatprep.subr.bf16.mxu0 0
    %252 = vmatpush2.bf16.xpose.msra.mxu0 0
    %253 = vmatprep.mubr.bf16.mxu0 0
    %254 = vmatmul.mubr.bf16.gmra.mxu0 %v216
    %v255 = vpop.f32.mrf.mxu0
    %v256 = vadd.f32 0.0, %v255
    %v257 = vpop.f32.mrf.mxu0
    %v258 = vpop.f32.mrf.mxu0
    %v259 = vadd.f32 0.0, %v258
    %v260 = vpop.f32.mrf.mxu0
    %261 = vdwg.mxu0
    %262 = vrot.lane.b32.xlu0 %v160, 96
    %v263 = vpop.permute.xlu0 %262
    %v265 = vsel %vm165, %v160, 0
    %v268 = vsel %vm165, %v263, 0
    %270 = vmatprep.subr.bf16.mxu0 0
    %271 = vmatpush1.bf16.xpose.msra.mxu0 0
    %272 = vmatprep.subr.bf16.mxu0 0
    %273 = vmatpush1.bf16.xpose.msra.mxu0 0
    %274 = vmatprep.subr.bf16.mxu0 0
    %275 = vmatpush1.bf16.xpose.msra.mxu0 0
    %276 = vmatprep.subr.bf16.mxu0 0
    %277 = vmatpush1.bf16.xpose.msra.mxu0 0
    %278 = vmatprep.subr.bf16.mxu0 0
    %279 = vmatpush1.bf16.xpose.msra.mxu0 0
    %280 = vmatprep.subr.bf16.mxu0 0
    %281 = vmatpush1.bf16.xpose.msra.mxu0 0
    %282 = vmatprep.subr.bf16.mxu0 0
    %283 = vmatpush1.bf16.xpose.msra.mxu0 0
    %284 = vmatprep.subr.bf16.mxu0 0
    %285 = vmatpush1.bf16.xpose.msra.mxu0 %v268
    %286 = vmatprep.subr.bf16.mxu0 0
    %287 = vmatpush2.bf16.xpose.msra.mxu0 0
    %288 = vmatprep.subr.bf16.mxu0 0
    %289 = vmatpush2.bf16.xpose.msra.mxu0 0
    %290 = vmatprep.subr.bf16.mxu0 0
    %291 = vmatpush2.bf16.xpose.msra.mxu0 0
    %292 = vmatprep.subr.bf16.mxu0 0
    %293 = vmatpush2.bf16.xpose.msra.mxu0 0
    %294 = vmatprep.subr.bf16.mxu0 0
    %295 = vmatpush2.bf16.xpose.msra.mxu0 0
    %296 = vmatprep.subr.bf16.mxu0 0
    %297 = vmatpush2.bf16.xpose.msra.mxu0 0
    %298 = vmatprep.subr.bf16.mxu0 0
    %299 = vmatpush2.bf16.xpose.msra.mxu0 0
    %300 = vmatprep.subr.bf16.mxu0 0
    %301 = vmatpush2.bf16.xpose.msra.mxu0 0
    %302 = vmatprep.mubr.bf16.mxu0 0
    %303 = vmatmul.mubr.bf16.gmra.mxu0 %v265
    %v304 = vpop.f32.mrf.mxu0
    %v305 = vadd.f32 0.0, %v304
    %v306 = vpop.f32.mrf.mxu0
    %v307 = vpop.f32.mrf.mxu0
    %v308 = vadd.f32 0.0, %v307
    %v309 = vpop.f32.mrf.mxu0
    %310 = vdwg.mxu0
    %311 = vrot.lane.b32.xlu0 %v162, 96
    %v312 = vpop.permute.xlu0 %311
    %v314 = vsel %vm165, %v162, 0
    %v317 = vsel %vm165, %v312, 0
    %319 = vmatprep.subr.bf16.mxu0 0
    %320 = vmatpush1.bf16.xpose.msra.mxu0 0
    %321 = vmatprep.subr.bf16.mxu0 0
    %322 = vmatpush1.bf16.xpose.msra.mxu0 0
    %323 = vmatprep.subr.bf16.mxu0 0
    %324 = vmatpush1.bf16.xpose.msra.mxu0 0
    %325 = vmatprep.subr.bf16.mxu0 0
    %326 = vmatpush1.bf16.xpose.msra.mxu0 0
    %327 = vmatprep.subr.bf16.mxu0 0
    %328 = vmatpush1.bf16.xpose.msra.mxu0 0
    %329 = vmatprep.subr.bf16.mxu0 0
    %330 = vmatpush1.bf16.xpose.msra.mxu0 0
    %331 = vmatprep.subr.bf16.mxu0 0
    %332 = vmatpush1.bf16.xpose.msra.mxu0 0
    %333 = vmatprep.subr.bf16.mxu0 0
    %334 = vmatpush1.bf16.xpose.msra.mxu0 %v317
    %335 = vmatprep.subr.bf16.mxu0 0
    %336 = vmatpush2.bf16.xpose.msra.mxu0 0
    %337 = vmatprep.subr.bf16.mxu0 0
    %338 = vmatpush2.bf16.xpose.msra.mxu0 0
    %339 = vmatprep.subr.bf16.mxu0 0
    %340 = vmatpush2.bf16.xpose.msra.mxu0 0
    %341 = vmatprep.subr.bf16.mxu0 0
    %342 = vmatpush2.bf16.xpose.msra.mxu0 0
    %343 = vmatprep.subr.bf16.mxu0 0
    %344 = vmatpush2.bf16.xpose.msra.mxu0 0
    %345 = vmatprep.subr.bf16.mxu0 0
    %346 = vmatpush2.bf16.xpose.msra.mxu0 0
    %347 = vmatprep.subr.bf16.mxu0 0
    %348 = vmatpush2.bf16.xpose.msra.mxu0 0
    %349 = vmatprep.subr.bf16.mxu0 0
    %350 = vmatpush2.bf16.xpose.msra.mxu0 0
    %351 = vmatprep.mubr.bf16.mxu0 0
    %352 = vmatmul.mubr.bf16.gmra.mxu0 %v314
    %v353 = vpop.f32.mrf.mxu0
    %v354 = vadd.f32 0.0, %v353
    %v355 = vpop.f32.mrf.mxu0
    %v356 = vpop.f32.mrf.mxu0
    %v357 = vadd.f32 0.0, %v356
    %v358 = vpop.f32.mrf.mxu0
    %359 = vdwg.mxu0
    %v360 = vmul.f32 %v207, 0.35355338
    %v361 = vmul.f32 %v210, 0.35355338
    %v362 = vmul.f32 %v256, 0.35355338
    %v363 = vmul.f32 %v259, 0.35355338
    %v364 = vmul.f32 %v305, 0.35355338
    %v365 = vmul.f32 %v308, 0.35355338
    %v366 = vmul.f32 %v354, 0.35355338
    %v367 = vmul.f32 %v357, 0.35355338
    %v368 = vld [vmem:[%s1] sm:$0xff]
    %v369 = vld [vmem:[%s1 + $0x8] sm:$0xff]
    %v370 = vadd.f32 %v360, %v368
    %v371 = vadd.f32 %v361, %v369
    %v372 = vadd.f32 %v362, %v368
    %v373 = vadd.f32 %v363, %v369
    %v374 = vadd.f32 %v364, %v368
    %v375 = vadd.f32 %v365, %v369
    %v376 = vadd.f32 %v366, %v368
    %v377 = vadd.f32 %v367, %v369
    %vm378 = vcmask 130048
    %v379 = vsel %vm378, %v370, -inf
    %380 = vmax.xlane.f32.xlu0 %v379
    %v381 = vpop.xlane.xlu0 %380
    %v382 = vsel %vm378, %v371, -inf
    %383 = vmax.xlane.f32.xlu0 %v382
    %v384 = vpop.xlane.xlu0 %383
    %v385 = vsel %vm378, %v372, -inf
    %386 = vmax.xlane.f32.xlu0 %v385
    %v387 = vpop.xlane.xlu0 %386
    %v388 = vsel %vm378, %v373, -inf
    %389 = vmax.xlane.f32.xlu0 %v388
    %v390 = vpop.xlane.xlu0 %389
    %v391 = vsel %vm378, %v374, -inf
    %392 = vmax.xlane.f32.xlu0 %v391
    %v393 = vpop.xlane.xlu0 %392
    %v394 = vsel %vm378, %v375, -inf
    %395 = vmax.xlane.f32.xlu0 %v394
    %v396 = vpop.xlane.xlu0 %395
    %v397 = vsel %vm378, %v376, -inf
    %398 = vmax.xlane.f32.xlu0 %v397
    %v399 = vpop.xlane.xlu0 %398
    %v400 = vsel %vm378, %v377, -inf
    %401 = vmax.xlane.f32.xlu0 %v400
    %v402 = vpop.xlane.xlu0 %401
    %v403 = vsub.f32 %v370, %v381
    %v404 = vsub.f32 %v371, %v384
    %v405 = vsub.f32 %v372, %v387
    %v406 = vsub.f32 %v373, %v390
    %v407 = vsub.f32 %v374, %v393
    %v408 = vsub.f32 %v375, %v396
    %v409 = vsub.f32 %v376, %v399
    %v410 = vsub.f32 %v377, %v402
    %v411 = vmul.f32 %v403, 1.442695
    %v412 = vpow.pop %v411
    %v413 = vmul.f32 %v404, 1.442695
    %v414 = vpow.pop %v413
    %v415 = vmul.f32 %v405, 1.442695
    %v416 = vpow.pop %v415
    %v417 = vmul.f32 %v406, 1.442695
    %v418 = vpow.pop %v417
    %v419 = vmul.f32 %v407, 1.442695
    %v420 = vpow.pop %v419
    %v421 = vmul.f32 %v408, 1.442695
    %v422 = vpow.pop %v421
    %v423 = vmul.f32 %v409, 1.442695
    %v424 = vpow.pop %v423
    %v425 = vmul.f32 %v410, 1.442695
    %v426 = vpow.pop %v425
    %v427 = vsel %vm378, %v412, 0.0
    %428 = vadd.xlane.f32.xlu0 %v427
    %v429 = vpop.xlane.xlu0 %428
    %v430 = vsel %vm378, %v414, 0.0
    %431 = vadd.xlane.f32.xlu0 %v430
    %v432 = vpop.xlane.xlu0 %431
    %v433 = vsel %vm378, %v416, 0.0
    %434 = vadd.xlane.f32.xlu0 %v433
    %v435 = vpop.xlane.xlu0 %434
    %v436 = vsel %vm378, %v418, 0.0
    %437 = vadd.xlane.f32.xlu0 %v436
    %v438 = vpop.xlane.xlu0 %437
    %v439 = vsel %vm378, %v420, 0.0
    %440 = vadd.xlane.f32.xlu0 %v439
    %v441 = vpop.xlane.xlu0 %440
    %v442 = vsel %vm378, %v422, 0.0
    %443 = vadd.xlane.f32.xlu0 %v442
    %v444 = vpop.xlane.xlu0 %443
    %v445 = vsel %vm378, %v424, 0.0
    %446 = vadd.xlane.f32.xlu0 %v445
    %v447 = vpop.xlane.xlu0 %446
    %v448 = vsel %vm378, %v426, 0.0
    %449 = vadd.xlane.f32.xlu0 %v448
    %v450 = vpop.xlane.xlu0 %449
    %v451 = vrcp.pop %v429
    %v452 = vmul.f32 %v412, %v451
    %v453 = vrcp.pop %v432
    %v454 = vmul.f32 %v414, %v453
    %v455 = vrcp.pop %v435
    %v456 = vmul.f32 %v416, %v455
    %v457 = vrcp.pop %v438
    %v458 = vmul.f32 %v418, %v457
    %v459 = vrcp.pop %v441
    %v460 = vmul.f32 %v420, %v459
    %v461 = vrcp.pop %v444
    %v462 = vmul.f32 %v422, %v461
    %v463 = vrcp.pop %v447
    %v464 = vmul.f32 %v424, %v463
    %v465 = vrcp.pop %v450
    %v466 = vmul.f32 %v426, %v465
    %v467 = vpack.c.bf16 %v454, %v452
    %v468 = vpack.c.bf16 %v458, %v456
    %v469 = vpack.c.bf16 %v462, %v460
    %v470 = vpack.c.bf16 %v466, %v464
    %471 = vrot.lane.b32.xlu0 %v155, 64
    %v472 = vpop.permute.xlu0 %471
    %v475 = vsel %vm378, %v467, 0
    %477 = vmatprep.subr.bf16.mxu0 0
    %478 = vmatpush1.bf16.msra.mxu0 0
    %479 = vmatprep.subr.bf16.mxu0 0
    %480 = vmatpush1.bf16.msra.mxu0 0
    %481 = vmatprep.subr.bf16.mxu0 0
    %482 = vmatpush1.bf16.msra.mxu0 0
    %483 = vmatprep.subr.bf16.mxu0 0
    %484 = vmatpush1.bf16.msra.mxu0 0
    %485 = vmatprep.subr.bf16.mxu0 0
    %486 = vmatpush1.bf16.msra.mxu0 0
    %487 = vmatprep.subr.bf16.mxu0 0
    %488 = vmatpush1.bf16.msra.mxu0 0
    %489 = vmatprep.subr.bf16.mxu0 0
    %490 = vmatpush1.bf16.msra.mxu0 0
    %491 = vmatprep.subr.bf16.mxu0 0
    %492 = vmatpush1.bf16.msra.mxu0 %v472
    %493 = vmatprep.subr.bf16.mxu0 0
    %494 = vmatpush2.bf16.msra.mxu0 0
    %495 = vmatprep.subr.bf16.mxu0 0
    %496 = vmatpush2.bf16.msra.mxu0 0
    %497 = vmatprep.subr.bf16.mxu0 0
    %498 = vmatpush2.bf16.msra.mxu0 0
    %499 = vmatprep.subr.bf16.mxu0 0
    %500 = vmatpush2.bf16.msra.mxu0 0
    %501 = vmatprep.subr.bf16.mxu0 0
    %502 = vmatpush2.bf16.msra.mxu0 0
    %503 = vmatprep.subr.bf16.mxu0 0
    %504 = vmatpush2.bf16.msra.mxu0 0
    %505 = vmatprep.subr.bf16.mxu0 0
    %506 = vmatpush2.bf16.msra.mxu0 0
    %507 = vmatprep.subr.bf16.mxu0 0
    %508 = vmatpush2.bf16.msra.mxu0 0
    %509 = vmatprep.mubr.bf16.mxu0 0
    %510 = vmatmul.mubr.bf16.gmra.mxu0 %v475
    %v511 = vpop.f32.mrf.mxu0
    %v512 = vadd.f32 0.0, %v511
    %v513 = vpop.f32.mrf.mxu0
    %v514 = vpop.f32.mrf.mxu0
    %v515 = vadd.f32 0.0, %v514
    %v516 = vpop.f32.mrf.mxu0
    %517 = vdwg.mxu0
    %518 = vrot.lane.b32.xlu0 %v158, 64
    %v519 = vpop.permute.xlu0 %518
    %v522 = vsel %vm378, %v468, 0
    %524 = vmatprep.subr.bf16.mxu0 0
    %525 = vmatpush1.bf16.msra.mxu0 0
    %526 = vmatprep.subr.bf16.mxu0 0
    %527 = vmatpush1.bf16.msra.mxu0 0
    %528 = vmatprep.subr.bf16.mxu0 0
    %529 = vmatpush1.bf16.msra.mxu0 0
    %530 = vmatprep.subr.bf16.mxu0 0
    %531 = vmatpush1.bf16.msra.mxu0 0
    %532 = vmatprep.subr.bf16.mxu0 0
    %533 = vmatpush1.bf16.msra.mxu0 0
    %534 = vmatprep.subr.bf16.mxu0 0
    %535 = vmatpush1.bf16.msra.mxu0 0
    %536 = vmatprep.subr.bf16.mxu0 0
    %537 = vmatpush1.bf16.msra.mxu0 0
    %538 = vmatprep.subr.bf16.mxu0 0
    %539 = vmatpush1.bf16.msra.mxu0 %v519
    %540 = vmatprep.subr.bf16.mxu0 0
    %541 = vmatpush2.bf16.msra.mxu0 0
    %542 = vmatprep.subr.bf16.mxu0 0
    %543 = vmatpush2.bf16.msra.mxu0 0
    %544 = vmatprep.subr.bf16.mxu0 0
    %545 = vmatpush2.bf16.msra.mxu0 0
    %546 = vmatprep.subr.bf16.mxu0 0
    %547 = vmatpush2.bf16.msra.mxu0 0
    %548 = vmatprep.subr.bf16.mxu0 0
    %549 = vmatpush2.bf16.msra.mxu0 0
    %550 = vmatprep.subr.bf16.mxu0 0
    %551 = vmatpush2.bf16.msra.mxu0 0
    %552 = vmatprep.subr.bf16.mxu0 0
    %553 = vmatpush2.bf16.msra.mxu0 0
    %554 = vmatprep.subr.bf16.mxu0 0
    %555 = vmatpush2.bf16.msra.mxu0 0
    %556 = vmatprep.mubr.bf16.mxu0 0
    %557 = vmatmul.mubr.bf16.gmra.mxu0 %v522
    %v558 = vpop.f32.mrf.mxu0
    %v559 = vadd.f32 0.0, %v558
    %v560 = vpop.f32.mrf.mxu0
    %v561 = vpop.f32.mrf.mxu0
    %v562 = vadd.f32 0.0, %v561
    %v563 = vpop.f32.mrf.mxu0
    %564 = vdwg.mxu0
    %565 = vrot.lane.b32.xlu0 %v160, 64
    %v566 = vpop.permute.xlu0 %565
    %v569 = vsel %vm378, %v469, 0
    %571 = vmatprep.subr.bf16.mxu0 0
    %572 = vmatpush1.bf16.msra.mxu0 0
    %573 = vmatprep.subr.bf16.mxu0 0
    %574 = vmatpush1.bf16.msra.mxu0 0
    %575 = vmatprep.subr.bf16.mxu0 0
    %576 = vmatpush1.bf16.msra.mxu0 0
    %577 = vmatprep.subr.bf16.mxu0 0
    %578 = vmatpush1.bf16.msra.mxu0 0
    %579 = vmatprep.subr.bf16.mxu0 0
    %580 = vmatpush1.bf16.msra.mxu0 0
    %581 = vmatprep.subr.bf16.mxu0 0
    %582 = vmatpush1.bf16.msra.mxu0 0
    %583 = vmatprep.subr.bf16.mxu0 0
    %584 = vmatpush1.bf16.msra.mxu0 0
    %585 = vmatprep.subr.bf16.mxu0 0
    %586 = vmatpush1.bf16.msra.mxu0 %v566
    %587 = vmatprep.subr.bf16.mxu0 0
    %588 = vmatpush2.bf16.msra.mxu0 0
    %589 = vmatprep.subr.bf16.mxu0 0
    %590 = vmatpush2.bf16.msra.mxu0 0
    %591 = vmatprep.subr.bf16.mxu0 0
    %592 = vmatpush2.bf16.msra.mxu0 0
    %593 = vmatprep.subr.bf16.mxu0 0
    %594 = vmatpush2.bf16.msra.mxu0 0
    %595 = vmatprep.subr.bf16.mxu0 0
    %596 = vmatpush2.bf16.msra.mxu0 0
    %597 = vmatprep.subr.bf16.mxu0 0
    %598 = vmatpush2.bf16.msra.mxu0 0
    %599 = vmatprep.subr.bf16.mxu0 0
    %600 = vmatpush2.bf16.msra.mxu0 0
    %601 = vmatprep.subr.bf16.mxu0 0
    %602 = vmatpush2.bf16.msra.mxu0 0
    %603 = vmatprep.mubr.bf16.mxu0 0
    %604 = vmatmul.mubr.bf16.gmra.mxu0 %v569
    %v605 = vpop.f32.mrf.mxu0
    %v606 = vadd.f32 0.0, %v605
    %v607 = vpop.f32.mrf.mxu0
    %v608 = vpop.f32.mrf.mxu0
    %v609 = vadd.f32 0.0, %v608
    %v610 = vpop.f32.mrf.mxu0
    %611 = vdwg.mxu0
    %612 = vrot.lane.b32.xlu0 %v162, 64
    %v613 = vpop.permute.xlu0 %612
    %v616 = vsel %vm378, %v470, 0
    %618 = vmatprep.subr.bf16.mxu0 0
    %619 = vmatpush1.bf16.msra.mxu0 0
    %620 = vmatprep.subr.bf16.mxu0 0
    %621 = vmatpush1.bf16.msra.mxu0 0
    %622 = vmatprep.subr.bf16.mxu0 0
    %623 = vmatpush1.bf16.msra.mxu0 0
    %624 = vmatprep.subr.bf16.mxu0 0
    %625 = vmatpush1.bf16.msra.mxu0 0
    %626 = vmatprep.subr.bf16.mxu0 0
    %627 = vmatpush1.bf16.msra.mxu0 0
    %628 = vmatprep.subr.bf16.mxu0 0
    %629 = vmatpush1.bf16.msra.mxu0 0
    %630 = vmatprep.subr.bf16.mxu0 0
    %631 = vmatpush1.bf16.msra.mxu0 0
    %632 = vmatprep.subr.bf16.mxu0 0
    %633 = vmatpush1.bf16.msra.mxu0 %v613
    %634 = vmatprep.subr.bf16.mxu0 0
    %635 = vmatpush2.bf16.msra.mxu0 0
    %636 = vmatprep.subr.bf16.mxu0 0
    %637 = vmatpush2.bf16.msra.mxu0 0
    %638 = vmatprep.subr.bf16.mxu0 0
    %639 = vmatpush2.bf16.msra.mxu0 0
    %640 = vmatprep.subr.bf16.mxu0 0
    %641 = vmatpush2.bf16.msra.mxu0 0
    %642 = vmatprep.subr.bf16.mxu0 0
    %643 = vmatpush2.bf16.msra.mxu0 0
    %644 = vmatprep.subr.bf16.mxu0 0
    %645 = vmatpush2.bf16.msra.mxu0 0
    %646 = vmatprep.subr.bf16.mxu0 0
    %647 = vmatpush2.bf16.msra.mxu0 0
    %648 = vmatprep.subr.bf16.mxu0 0
    %649 = vmatpush2.bf16.msra.mxu0 0
    %650 = vmatprep.mubr.bf16.mxu0 0
    %651 = vmatmul.mubr.bf16.gmra.mxu0 %v616
    %v652 = vpop.f32.mrf.mxu0
    %v653 = vadd.f32 0.0, %v652
    %v654 = vpop.f32.mrf.mxu0
    %v655 = vpop.f32.mrf.mxu0
    %v656 = vadd.f32 0.0, %v655
    %v657 = vpop.f32.mrf.mxu0
    %658 = vdwg.mxu0
    %661 = vrot.lane.b32.xlu0 %v559, 8
    %v662 = vpop.permute.xlu0 %661
    %663 = vrot.lane.b32.xlu0 %v562, 8
    %v664 = vpop.permute.xlu0 %663
    %669 = vrot.lane.b32.xlu0 %v606, 16
    %v670 = vpop.permute.xlu0 %669
    %671 = vrot.lane.b32.xlu0 %v609, 16
    %v672 = vpop.permute.xlu0 %671
    %677 = vrot.lane.b32.xlu0 %v653, 24
    %v678 = vpop.permute.xlu0 %677
    %679 = vrot.lane.b32.xlu0 %v656, 24
    %v680 = vpop.permute.xlu0 %679
    %v683 = vsel %vm165, %v512, %v662
    %v684 = vsel %vm165, %v515, %v664
    %v685 = vsel %vm378, %v683, %v670
    %v686 = vsel %vm378, %v684, %v672
    %vm687 = vcmask 195584
    %v688 = vsel %vm687, %v685, %v678
    %v689 = vsel %vm687, %v686, %v680
    %v690 = vpack.c.bf16 %v689, %v688
    %v691 = vld [vmem:[%s4] sm:$0xf]
    %v692 = vld [vmem:[%s4 + $0x4] sm:$0xf]
    %v693 = vld [vmem:[%s4 + $0x8] sm:$0xf]
    %v694 = vld [vmem:[%s4 + $0xc] sm:$0xf]
    %v695 = vlaneseq
    %v696 = vshrl.u32 %v695, 7
    %v697 = vsub.s32 0, %v696
    %v698 = vrot.slane %v46, %v697
    %v703 = vunpack.c.l.b16 %v691
    %v704 = vunpack.c.l.b16 %v692
    %v705 = vunpack.c.l.b16 %v693
    %v706 = vunpack.c.l.b16 %v694
    %v707 = vpack.c.b16 %v704, %v703
    %v708 = vpack.c.b16 %v706, %v705
    %v712 = vsel %vm50, %v690, 0
    %714 = vmatprep.subr.bf16.mxu0 0
    %715 = vmatpush1.bf16.msra.mxu0 0
    %716 = vmatprep.subr.bf16.mxu0 0
    %717 = vmatpush1.bf16.msra.mxu0 0
    %718 = vmatprep.subr.bf16.mxu0 0
    %719 = vmatpush1.bf16.msra.mxu0 0
    %720 = vmatprep.subr.bf16.mxu0 0
    %721 = vmatpush1.bf16.msra.mxu0 0
    %722 = vmatprep.subr.bf16.mxu0 0
    %723 = vmatpush1.bf16.msra.mxu0 0
    %724 = vmatprep.subr.bf16.mxu0 0
    %725 = vmatpush1.bf16.msra.mxu0 0
    %726 = vmatprep.subr.bf16.mxu0 0
    %727 = vmatpush1.bf16.msra.mxu0 %v708
    %728 = vmatprep.subr.bf16.mxu0 0
    %729 = vmatpush1.bf16.msra.mxu0 %v707
    %730 = vmatprep.subr.bf16.mxu0 0
    %731 = vmatpush2.bf16.msra.mxu0 0
    %732 = vmatprep.subr.bf16.mxu0 0
    %733 = vmatpush2.bf16.msra.mxu0 0
    %734 = vmatprep.subr.bf16.mxu0 0
    %735 = vmatpush2.bf16.msra.mxu0 0
    %736 = vmatprep.subr.bf16.mxu0 0
    %737 = vmatpush2.bf16.msra.mxu0 0
    %738 = vmatprep.subr.bf16.mxu0 0
    %739 = vmatpush2.bf16.msra.mxu0 0
    %740 = vmatprep.subr.bf16.mxu0 0
    %741 = vmatpush2.bf16.msra.mxu0 0
    %742 = vmatprep.subr.bf16.mxu0 0
    %743 = vmatpush2.bf16.msra.mxu0 0
    %744 = vmatprep.subr.bf16.mxu0 0
    %745 = vmatpush2.bf16.msra.mxu0 0
    %746 = vmatprep.mubr.bf16.mxu0 0
    %747 = vmatmul.mubr.bf16.gmra.mxu0 %v712
    %v748 = vpop.f32.mrf.mxu0
    %v749 = vadd.f32 %v698, %v748
    %v750 = vpop.f32.mrf.mxu0
    %v751 = vpop.f32.mrf.mxu0
    %v752 = vadd.f32 %v698, %v751
    %v753 = vpop.f32.mrf.mxu0
    %754 = vdwg.mxu0
    %v755 = vadd.f32 %v40, %v749
    %v756 = vadd.f32 %v41, %v752
    %v757 = vsel %vm50, %v755, 0.0
    %758 = vadd.xlane.f32.xlu0 %v757
    %v759 = vpop.xlane.xlu0 %758
    %v760 = vsel %vm50, %v756, 0.0
    %761 = vadd.xlane.f32.xlu0 %v760
    %v762 = vpop.xlane.xlu0 %761
    %v763 = vmul.f32 %v759, %v57
    %v764 = vmul.f32 %v762, %v57
    %v765 = vsub.f32 %v755, %v763
    %v766 = vsub.f32 %v756, %v764
    %v767 = vmul.f32 %v765, %v765
    %v768 = vmul.f32 %v766, %v766
    %v769 = vsel %vm50, %v767, 0.0
    %770 = vadd.xlane.f32.xlu0 %v769
    %v771 = vpop.xlane.xlu0 %770
    %v772 = vsel %vm50, %v768, 0.0
    %773 = vadd.xlane.f32.xlu0 %v772
    %v774 = vpop.xlane.xlu0 %773
    %v775 = vmul.f32 %v771, %v57
    %v776 = vmul.f32 %v774, %v57
    %v777 = vadd.f32 %v775, 1e-05
    %v778 = vadd.f32 %v776, 1e-05
    %v779 = vrsqrt.pop %v777
    %v780 = vrsqrt.pop %v778
    %v781 = vmul.f32 %v765, %v779
    %v782 = vmul.f32 %v766, %v780
    %v783 = vlaneseq
    %v784 = vshrl.u32 %v783, 7
    %v785 = vsub.s32 0, %v784
    %v786 = vrot.slane %v44, %v785
    %v787 = vmul.f32 %v781, %v786
    %v788 = vmul.f32 %v782, %v786
    %v789 = vlaneseq
    %v790 = vshrl.u32 %v789, 7
    %v791 = vsub.s32 0, %v790
    %v792 = vrot.slane %v45, %v791
    %v793 = vadd.f32 %v787, %v792
    %v794 = vadd.f32 %v788, %v792
    %v795 = vpack.c.bf16 %v794, %v793
    %v796 = vld [vmem:[%s5] sm:$0xf]
    %v797 = vld [vmem:[%s5 + $0x4] sm:$0xf]
    %v798 = vld [vmem:[%s5 + $0x8] sm:$0xf]
    %v799 = vld [vmem:[%s5 + $0xc] sm:$0xf]
    %v800 = vlaneseq
    %v801 = vshrl.u32 %v800, 7
    %v802 = vsub.s32 0, %v801
    %v803 = vrot.slane %v49, %v802
    %v808 = vunpack.c.l.b16 %v796
    %v809 = vunpack.c.l.b16 %v797
    %v810 = vunpack.c.l.b16 %v798
    %v811 = vunpack.c.l.b16 %v799
    %v812 = vpack.c.b16 %v809, %v808
    %v813 = vpack.c.b16 %v811, %v810
    %v817 = vsel %vm50, %v795, 0
    %819 = vmatprep.subr.bf16.mxu0 0
    %820 = vmatpush1.bf16.msra.mxu0 0
    %821 = vmatprep.subr.bf16.mxu0 0
    %822 = vmatpush1.bf16.msra.mxu0 0
    %823 = vmatprep.subr.bf16.mxu0 0
    %824 = vmatpush1.bf16.msra.mxu0 0
    %825 = vmatprep.subr.bf16.mxu0 0
    %826 = vmatpush1.bf16.msra.mxu0 0
    %827 = vmatprep.subr.bf16.mxu0 0
    %828 = vmatpush1.bf16.msra.mxu0 0
    %829 = vmatprep.subr.bf16.mxu0 0
    %830 = vmatpush1.bf16.msra.mxu0 0
    %831 = vmatprep.subr.bf16.mxu0 0
    %832 = vmatpush1.bf16.msra.mxu0 %v813
    %833 = vmatprep.subr.bf16.mxu0 0
    %834 = vmatpush1.bf16.msra.mxu0 %v812
    %835 = vmatprep.subr.bf16.mxu0 0
    %836 = vmatpush2.bf16.msra.mxu0 0
    %837 = vmatprep.subr.bf16.mxu0 0
    %838 = vmatpush2.bf16.msra.mxu0 0
    %839 = vmatprep.subr.bf16.mxu0 0
    %840 = vmatpush2.bf16.msra.mxu0 0
    %841 = vmatprep.subr.bf16.mxu0 0
    %842 = vmatpush2.bf16.msra.mxu0 0
    %843 = vmatprep.subr.bf16.mxu0 0
    %844 = vmatpush2.bf16.msra.mxu0 0
    %845 = vmatprep.subr.bf16.mxu0 0
    %846 = vmatpush2.bf16.msra.mxu0 0
    %847 = vmatprep.subr.bf16.mxu0 0
    %848 = vmatpush2.bf16.msra.mxu0 0
    %849 = vmatprep.subr.bf16.mxu0 0
    %850 = vmatpush2.bf16.msra.mxu0 0
    %851 = vmatprep.mubr.bf16.mxu0 0
    %852 = vmatmul.mubr.bf16.gmra.mxu0 %v817
    %v853 = vpop.f32.mrf.mxu0
    %v854 = vadd.f32 %v803, %v853
    %v855 = vpop.f32.mrf.mxu0
    %v856 = vpop.f32.mrf.mxu0
    %v857 = vadd.f32 %v803, %v856
    %v858 = vpop.f32.mrf.mxu0
    %859 = vdwg.mxu0
    %v860 = vmul.f32 %v854, 0.5
    %v861 = vmul.f32 %v857, 0.5
    %v862 = vmul.f32 %v854, 0.044715
    %v863 = vmul.f32 %v857, 0.044715
    %v864 = vmul.f32 %v862, %v854
    %v865 = vmul.f32 %v863, %v857
    %v866 = vmul.f32 %v864, %v854
    %v867 = vmul.f32 %v865, %v857
    %v868 = vadd.f32 %v854, %v866
    %v869 = vadd.f32 %v857, %v867
    %v870 = vmul.f32 %v868, 0.7978846
    %v871 = vmul.f32 %v869, 0.7978846
    %v872 = vtanh.pop %v870
    %v873 = vtanh.pop %v871
    %v874 = vadd.f32 %v872, 1.0
    %v875 = vadd.f32 %v873, 1.0
    %v876 = vmul.f32 %v860, %v874
    %v877 = vmul.f32 %v861, %v875
    %v878 = vpack.c.bf16 %v877, %v876
    %v879 = vld [vmem:[%s6] sm:$0xf]
    %v880 = vld [vmem:[%s6 + $0x4] sm:$0xf]
    %v881 = vld [vmem:[%s6 + $0x8] sm:$0xf]
    %v882 = vld [vmem:[%s6 + $0xc] sm:$0xf]
    %v883 = vld [vmem:[%s6 + $0x10] sm:$0xf]
    %v884 = vld [vmem:[%s6 + $0x14] sm:$0xf]
    %v885 = vld [vmem:[%s6 + $0x18] sm:$0xf]
    %v886 = vld [vmem:[%s6 + $0x1c] sm:$0xf]
    %v887 = vld [vmem:[%s6 + $0x20] sm:$0xf]
    %v888 = vld [vmem:[%s6 + $0x24] sm:$0xf]
    %v889 = vld [vmem:[%s6 + $0x28] sm:$0xf]
    %v890 = vld [vmem:[%s6 + $0x2c] sm:$0xf]
    %v891 = vld [vmem:[%s6 + $0x30] sm:$0xf]
    %v892 = vld [vmem:[%s6 + $0x34] sm:$0xf]
    %v893 = vld [vmem:[%s6 + $0x38] sm:$0xf]
    %v894 = vld [vmem:[%s6 + $0x3c] sm:$0xf]
    %v895 = vlaneseq
    %v896 = vshrl.u32 %v895, 7
    %v897 = vsub.s32 0, %v896
    %v898 = vrot.slane %v47, %v897
    %v915 = vunpack.c.l.b16 %v879
    %v916 = vunpack.c.l.b16 %v880
    %v917 = vunpack.c.l.b16 %v881
    %v918 = vunpack.c.l.b16 %v882
    %v919 = vunpack.c.l.b16 %v883
    %v920 = vunpack.c.l.b16 %v884
    %v921 = vunpack.c.l.b16 %v885
    %v922 = vunpack.c.l.b16 %v886
    %v923 = vunpack.c.l.b16 %v887
    %v924 = vunpack.c.l.b16 %v888
    %v925 = vunpack.c.l.b16 %v889
    %v926 = vunpack.c.l.b16 %v890
    %v927 = vunpack.c.l.b16 %v891
    %v928 = vunpack.c.l.b16 %v892
    %v929 = vunpack.c.l.b16 %v893
    %v930 = vunpack.c.l.b16 %v894
    %v931 = vpack.c.b16 %v916, %v915
    %v932 = vpack.c.b16 %v918, %v917
    %v933 = vpack.c.b16 %v920, %v919
    %v934 = vpack.c.b16 %v922, %v921
    %v935 = vpack.c.b16 %v924, %v923
    %v936 = vpack.c.b16 %v926, %v925
    %v937 = vpack.c.b16 %v928, %v927
    %v938 = vpack.c.b16 %v930, %v929
    %947 = vmatprep.subr.bf16.mxu0 0
    %948 = vmatpush1.bf16.msra.mxu0 %v938
    %949 = vmatprep.subr.bf16.mxu0 0
    %950 = vmatpush1.bf16.msra.mxu0 %v937
    %951 = vmatprep.subr.bf16.mxu0 0
    %952 = vmatpush1.bf16.msra.mxu0 %v936
    %953 = vmatprep.subr.bf16.mxu0 0
    %954 = vmatpush1.bf16.msra.mxu0 %v935
    %955 = vmatprep.subr.bf16.mxu0 0
    %956 = vmatpush1.bf16.msra.mxu0 %v934
    %957 = vmatprep.subr.bf16.mxu0 0
    %958 = vmatpush1.bf16.msra.mxu0 %v933
    %959 = vmatprep.subr.bf16.mxu0 0
    %960 = vmatpush1.bf16.msra.mxu0 %v932
    %961 = vmatprep.subr.bf16.mxu0 0
    %962 = vmatpush1.bf16.msra.mxu0 %v931
    %963 = vmatprep.subr.bf16.mxu0 0
    %964 = vmatpush2.bf16.msra.mxu0 0
    %965 = vmatprep.subr.bf16.mxu0 0
    %966 = vmatpush2.bf16.msra.mxu0 0
    %967 = vmatprep.subr.bf16.mxu0 0
    %968 = vmatpush2.bf16.msra.mxu0 0
    %969 = vmatprep.subr.bf16.mxu0 0
    %970 = vmatpush2.bf16.msra.mxu0 0
    %971 = vmatprep.subr.bf16.mxu0 0
    %972 = vmatpush2.bf16.msra.mxu0 0
    %973 = vmatprep.subr.bf16.mxu0 0
    %974 = vmatpush2.bf16.msra.mxu0 0
    %975 = vmatprep.subr.bf16.mxu0 0
    %976 = vmatpush2.bf16.msra.mxu0 0
    %977 = vmatprep.subr.bf16.mxu0 0
    %978 = vmatpush2.bf16.msra.mxu0 0
    %979 = vmatprep.mubr.bf16.mxu0 0
    %980 = vmatmul.mubr.bf16.gmra.mxu0 %v878
    %v981 = vpop.f32.mrf.mxu0
    %v982 = vadd.f32 %v898, %v981
    %v983 = vpop.f32.mrf.mxu0
    %v984 = vpop.f32.mrf.mxu0
    %v985 = vadd.f32 %v898, %v984
    %v986 = vpop.f32.mrf.mxu0
    %987 = vdwg.mxu0
    %v988 = vadd.f32 %v755, %v982
    %v989 = vadd.f32 %v756, %v985
    %990 = vst.msk [vmem:[#allocation5] sm:$0xff] %vm50, %v988
    %991 = vst.msk [vmem:[#allocation5 + $0x8] sm:$0xff] %vm50, %v989
    // Predicated region
    $region34: #{tpu_custom_call.1} parent=1 // pred_check
      _
    $region35: #{tpu_custom_call.1} parent=1 // pred_check_branch
      %993 = sbr.rel (0) target = $region37
    $region36: #{tpu_custom_call.1} parent=1 // pred_region
      %s995 = ssub.s32 256, 256
      %996 = vsyncadd [#allocation4], %s995
      %s997 = sshll.u32 [#allocation5], 4
      %s998 = int_to_ptr.vmem [resolvable:$true] %s997
      %1003 = dma.vmem_to_hbm [thread:$0]  %s998, 256, %s7, [#allocation4], 128, 128, 8
    $region37: #{tpu_custom_call.1} parent=1 // pred_fallthru
      _
    // Predicated region
    $region38: #{tpu_custom_call.1} parent=1 // pred_check
      _
    $region39: #{tpu_custom_call.1} parent=1 // pred_check_branch
      %1005 = sbr.rel (0) target = $region41
    $region40: #{tpu_custom_call.1} parent=1 // pred_region
      %1006 = dma.done [#allocation4], 256
    $region41: #{tpu_custom_call.1} parent=1 // pred_fallthru
      _
    %1007 = vsyncpa [#allocation3], 1
    %1008 = vsyncpa [#allocation4], 1

</llo_original>
